<compile_context>
chip_gen: v6e
topology: v6e:2x2x1
jax: 0.10.0
libtpu: 0.0.40
codegen_flags: <defaults>
</compile_context>

<pallas_src>
import jax
import jax.numpy as jnp
from jax.experimental import pallas as pl
from jax.experimental.pallas import tpu as pltpu

NEG_SLOPE = 0.1

# Lane-dense candidate widths (all multiples of 128), widest first.
_LANE_CANDIDATES = (1024, 512, 256, 128)
# Below this total size a single exact block is used (megacore split / extra
# grid steps only add per-step overhead for tiny activations).
_MIN_SPLIT_BYTES = 256 * 1024
# Sublane granularity per element size: f32 packs 8 rows/vreg, bf16 16, i8 32.
_SUBLANE_BY_ITEMSIZE = {4: 8, 2: 16, 1: 32}


def _round_up(x, m):
    return ((x + m - 1) // m) * m


def _tile_budget_bytes():
    """Per-input-tile byte budget, chosen per TPU generation (trace-time)."""
    try:
        info = pltpu.get_tpu_info()
        vmem = getattr(info, "vmem_capacity_bytes", 128 * 1024 * 1024)
        if vmem <= 64 * 1024 * 1024:
            # v7x: faster HBM -> bigger tiles to amortize per-step overhead.
            return 6 * 1024 * 1024
        return 4 * 1024 * 1024  # v5e / v6e
    except Exception:
        return 4 * 1024 * 1024


def _leaky_relu_kernel(x_ref, o_ref):
    x = x_ref[...]
    # NEG_SLOPE stays weakly typed -> bf16 inputs stay bf16 end-to-end.
    o_ref[...] = jnp.where(x > 0, x, x * NEG_SLOPE)


def _run_slab(slab):
    """leaky_relu over a lane-dense (rows, lanes) slab via pallas_call."""
    rows, lanes = slab.shape
    itemsize = jnp.dtype(slab.dtype).itemsize
    sub = _SUBLANE_BY_ITEMSIZE.get(itemsize, 8)
    total_bytes = rows * lanes * itemsize
    n = rows * lanes

    tile_bytes = _tile_budget_bytes()
    target_rows = max(sub, (tile_bytes // (lanes * itemsize)) // sub * sub)

    if total_bytes <= _MIN_SPLIT_BYTES or rows <= sub:
        # Tiny slab: single exact block (block dim == full array dim is legal).
        row_tile = rows
    else:
        # At least 2 steps (so both v7x TensorCores stream), even step count
        # for balance, tile rows a multiple of the dtype's sublane pack.
        steps = max(2, pl.cdiv(rows, target_rows))
        if steps % 2:
            steps += 1
        row_tile = min(rows, _round_up(pl.cdiv(rows, steps), sub))

    grid = (pl.cdiv(rows, row_tile),)  # non-exact grid: tail block is clipped

    return pl.pallas_call(
        _leaky_relu_kernel,
        out_shape=jax.ShapeDtypeStruct((rows, lanes), slab.dtype),
        grid_spec=pltpu.PrefetchScalarGridSpec(
            num_scalar_prefetch=0,
            grid=grid,
            in_specs=[pl.BlockSpec((row_tile, lanes), lambda i: (i, 0))],
            out_specs=pl.BlockSpec((row_tile, lanes), lambda i: (i, 0)),
        ),
        compiler_params=pltpu.CompilerParams(
            dimension_semantics=("parallel",),
            # Explicit limit so 4-6 MiB tiles (x2 arrays x2 buffers <= 24 MiB)
            # are safe even under v5e's 16 MiB scoped default.
            vmem_limit_bytes=32 * 1024 * 1024,
        ),
        cost_estimate=pl.CostEstimate(
            flops=n, transcendentals=0, bytes_accessed=2 * n * itemsize),
    )(slab)


def leaky_relu_pallas(x):
    """Elementwise leaky_relu(x, 0.1) matching torch.nn.functional.leaky_relu."""
    orig_shape = x.shape
    n = x.size
    if n == 0:
        return x

    flat = x.reshape(-1)  # layout-preserving for row-major; no HBM copy

    # Widest lane-dense width that divides n exactly -> no padding, no copies.
    lanes = next((c for c in _LANE_CANDIDATES if n % c == 0), None)
    if lanes is not None:
        out = _run_slab(flat.reshape(n // lanes, lanes))
        return out.reshape(orig_shape)

    # Ragged tail (n % 128 != 0), rare for HiFi-GAN activations: run the kernel
    # on the 128-aligned prefix and finish the <128-element tail with plain
    # jnp, then stitch together (cheaper than the old pad + slice round-trip).
    n_main = (n // 128) * 128
    tail = flat[n_main:]
    tail_out = jnp.where(tail > 0, tail, tail * NEG_SLOPE)
    if n_main == 0:
        return tail_out.reshape(orig_shape)
    main_out = _run_slab(flat[:n_main].reshape(n_main // 128, 128)).reshape(-1)
    return jnp.concatenate([main_out, tail_out]).reshape(orig_shape)


def _ref(x):
    return jnp.where(x > 0, x, NEG_SLOPE * x)


if __name__ == "__main__":
    key = jax.random.PRNGKey(0)
    fn = jax.jit(leaky_relu_pallas)

    # 1) HiFi-GAN-style activation tensor; 2*4*16*16 = 2048 elements hits the
    #    no-pad, lane-dense (1024-wide) path.
    x = jax.random.normal(key, (2, 4, 16, 16), dtype=jnp.float32)
    y = jax.block_until_ready(fn(x))
    assert y.shape == x.shape and y.dtype == x.dtype
    assert jnp.allclose(y, _ref(x), atol=1e-6), "mismatch (f32 main path)"

    # 2) bf16 inputs stay bf16 (weak-typed slope); loose tolerance per review.
    xb = jax.random.normal(jax.random.PRNGKey(2), (2, 4, 16, 16)).astype(jnp.bfloat16)
    yb = jax.block_until_ready(fn(xb))
    assert yb.dtype == jnp.bfloat16 and yb.shape == xb.shape
    assert jnp.allclose(yb.astype(jnp.float32), _ref(xb).astype(jnp.float32),
                        atol=1e-2, rtol=1e-2), "mismatch (bf16 path)"

    # 3) Medium array (1 MiB) exercises the multi-step (>=2, even) grid path.
    xm = jax.random.normal(jax.random.PRNGKey(3), (4, 128, 512), dtype=jnp.float32)
    ym = jax.block_until_ready(fn(xm))
    assert jnp.allclose(ym, _ref(xm), atol=1e-6), "mismatch (multi-step path)"

    # 4) Ragged size (3*7*13 = 273; n % 128 != 0) exercises prefix + tail path.
    x2 = jax.random.normal(jax.random.PRNGKey(1), (3, 7, 13), dtype=jnp.float32)
    y2 = jax.block_until_ready(fn(x2))
    assert y2.shape == x2.shape and y2.dtype == x2.dtype
    assert jnp.allclose(y2, _ref(x2), atol=1e-6), "mismatch (ragged path)"

    print("KERNEL_OK")
</pallas_src>

<mosaic_0001>
module attributes {stable_mosaic.version = 11 : i64} {
  func.func @_leaky_relu_kernel(%arg0: i32, %arg1: memref<2x1024xf32, #tpu.memory_space<vmem>>, %arg2: memref<2x1024xf32, #tpu.memory_space<vmem>>) attributes {dimension_semantics = [#tpu.dimension_semantics<parallel>], iteration_bounds = array<i64: 1>, scalar_prefetch = 0 : i64, scratch_operands = 0 : i64, tpu.core_type = #tpu.core_type<tc>, window_params = [{transform_indices = @transform_0, window_bounds = array<i64: 2, 1024>}, {transform_indices = @transform_1, window_bounds = array<i64: 2, 1024>}]} {
    %c0 = arith.constant 0 : index
    %c0_0 = arith.constant 0 : index
    %0 = vector.load %arg1[%c0, %c0_0] : memref<2x1024xf32, #tpu.memory_space<vmem>>, vector<2x1024xf32>
    %cst = arith.constant 0.000000e+00 : f32
    %1 = vector.broadcast %cst : f32 to vector<2x1024xf32>
    %2 = arith.cmpf ogt, %0, %1 : vector<2x1024xf32>
    %cst_1 = arith.constant 1.000000e-01 : f32
    %3 = vector.broadcast %cst_1 : f32 to vector<2x1024xf32>
    %4 = arith.mulf %0, %3 : vector<2x1024xf32>
    %5 = arith.select %2, %0, %4 : vector<2x1024xi1>, vector<2x1024xf32>
    %c0_2 = arith.constant 0 : index
    %c0_3 = arith.constant 0 : index
    %6 = vector.load %arg2[%c0_2, %c0_3] : memref<2x1024xf32, #tpu.memory_space<vmem>>, vector<2x1024xf32>
    tpu.vector_store %arg2[%c0_2, %c0_3], %5 {strides = array<i32>} : memref<2x1024xf32, #tpu.memory_space<vmem>>, vector<2x1024xf32>,
    return
  }
  func.func @transform_0(%arg0: i32) -> (i32, i32) {
    %c0_i32 = arith.constant 0 : i32
    %c0_i32_0 = arith.constant 0 : i32
    return %arg0, %c0_i32 : i32, i32
  }
  func.func @transform_1(%arg0: i32) -> (i32, i32) {
    %c0_i32 = arith.constant 0 : i32
    %c0_i32_0 = arith.constant 0 : i32
    return %arg0, %c0_i32 : i32, i32
  }
}

</mosaic_0001>

<llo_original>
// kernel: leaky_relu_pallas.1
$region0: #{leaky_relu_pallas.1}
  #allocation0 [shape = 'u32[]', space=smem, size = 0x4, offset = 0x4, fixed_abs, tag = 'smem constant byte address 0x4 - core index']
  #allocation1 [shape = 'u32[144,128]{1,0:T(1,128)}', space=vmem, size = 0x12000, scoped, tag = 'internal scratch']
  %s0 = inlined_call_operand.vmem [shape: f32[2,1024], index: 0, kind: input, shape index: {}]
  %s1 = inlined_call_operand.vmem [shape: f32[2,1024], index: 1, kind: output, shape index: {}]
  %s2 = sld [smem:[#allocation0]]
  $region14: #{leaky_relu_pallas.1} parent=0
    _
  %s4 = ssub.s32 1, %s2
  %s5 = scalar_select 0, %s4, %s2
  // Predicated region
  $region2: #{leaky_relu_pallas.1} parent=0 // pred_check
    _
  $region3: #{leaky_relu_pallas.1} parent=0 // pred_check_branch
    %7 = sbr.rel (0) target = $region5
  $region4: #{leaky_relu_pallas.1} parent=0 // pred_region
    _
  $region5: #{leaky_relu_pallas.1} parent=0 // pred_fallthru
    _
  %v8 = vld [vmem:[%s0] sm:$0xff]
  %v9 = vld [vmem:[%s0 + $0x8] sm:$0xff]
  %vm10 = vcmp.gt.f32.partialorder %v8, 0.0
  %vm11 = vcmp.gt.f32.partialorder %v9, 0.0
  %v12 = vmul.f32 %v8, 0.1
  %v13 = vmul.f32 %v9, 0.1
  %v14 = vsel %vm10, %v8, %v12
  %v15 = vsel %vm11, %v9, %v13
  %16 = vst [vmem:[%s1] sm:$0xff] %v14
  %17 = vst [vmem:[%s1 + $0x8] sm:$0xff] %v15
  // Predicated region
  $region6: #{leaky_relu_pallas.1} parent=0 // pred_check
    _
  $region7: #{leaky_relu_pallas.1} parent=0 // pred_check_branch
    %19 = sbr.rel (0) target = $region9
  $region8: #{leaky_relu_pallas.1} parent=0 // pred_region
    _
  $region9: #{leaky_relu_pallas.1} parent=0 // pred_fallthru
    _
  // Predicated region
  $region10: #{leaky_relu_pallas.1} parent=0 // pred_check
    _
  $region11: #{leaky_relu_pallas.1} parent=0 // pred_check_branch
    %21 = sbr.rel (0) target = $region13
  $region12: #{leaky_relu_pallas.1} parent=0 // pred_region
    _
  $region13: #{leaky_relu_pallas.1} parent=0 // pred_fallthru
    _

</llo_original>
